<compile_context>
chip_gen: v6e
topology: v6e:2x2x1
jax: 0.10.0
libtpu: 0.0.40
codegen_flags: <defaults>
</compile_context>

<pallas_src>
import math
import functools

import jax
import jax.numpy as jnp
from jax.experimental import pallas as pl
from jax.experimental.pallas import tpu as pltpu


_LANES = 128
# v6e/v7x have bf16 VPU/EUP -> exp over the score block runs at packed rate.
# Set to False on v5e (no bf16 EUP; the casts would only add work).
_EXP_IN_BF16 = True


def _pick_tile(dim, target, multiples):
    """Largest tile <= target that divides `dim`, trying coarse granules first.
    Falls back to the full dim (always layout-legal)."""
    if dim <= target:
        return dim
    for m in multiples:
        t = (target // m) * m
        while t >= m:
            if dim % t == 0:
                return t
            t -= m
    return dim


def _lane_bcast(x_rep, n):
    """x_rep: (rows, L) with identical values replicated across lanes -> (rows, n)."""
    L = x_rep.shape[-1]
    if n == L:
        return x_rep
    if n < L:
        return x_rep[:, :n]
    if n % L == 0:
        return jnp.tile(x_rep, (1, n // L))      # lane-tile (XLU), stays replicated
    return jnp.broadcast_to(x_rep[:, :1], (x_rep.shape[0], n))


# ---------------------------------------------------------------------------
# Kernel 1: tiled linear layer  y = x @ W_t + b     (W_t pre-transposed: Cin x Cout)
# ---------------------------------------------------------------------------
def _linear_kernel(x_ref, w_ref, b_ref, o_ref, acc_ref):
    k = pl.program_id(2)

    @pl.when(k == 0)
    def _():
        acc_ref[...] = jnp.zeros_like(acc_ref)

    # x streamed f32, cast to bf16 in-kernel; bf16 x bf16 -> f32 on the MXU.
    acc_ref[...] += jnp.dot(x_ref[...].astype(jnp.bfloat16), w_ref[...],
                            preferred_element_type=jnp.float32)

    @pl.when(k == pl.num_programs(2) - 1)
    def _():
        o_ref[...] = (acc_ref[...] + b_ref[...]).astype(o_ref.dtype)


def linear(x2d, w_t, bias, *, out_dtype=jnp.float32,
           tm_target=512, tn_target=512, tk_target=512):
    """x2d: (M, Cin) f32; w_t: (Cin, Cout) bf16; bias: (Cout,) -> (M, Cout)."""
    M, Cin = x2d.shape
    Cout = w_t.shape[1]

    tm = _pick_tile(M, tm_target, (8,))
    # 256-granular first: a full MXU pass on v6e/v7x (2x256x256); 128 fallback (v5e).
    tn = _pick_tile(Cout, tn_target, (256, 128))
    tk = _pick_tile(Cin, tk_target, (256, 128))

    w_b = w_t if w_t.dtype == jnp.bfloat16 else w_t.astype(jnp.bfloat16)
    b2d = bias.reshape(1, Cout).astype(jnp.float32)

    return pl.pallas_call(
        _linear_kernel,
        out_shape=jax.ShapeDtypeStruct((M, Cout), out_dtype),
        grid_spec=pltpu.PrefetchScalarGridSpec(
            num_scalar_prefetch=0,
            grid=(M // tm, Cout // tn, Cin // tk),
            in_specs=[
                pl.BlockSpec((tm, tk), lambda i, j, k: (i, k)),
                pl.BlockSpec((tk, tn), lambda i, j, k: (k, j)),
                pl.BlockSpec((1, tn), lambda i, j, k: (0, j)),
            ],
            out_specs=pl.BlockSpec((tm, tn), lambda i, j, k: (i, j)),
            scratch_shapes=[pltpu.VMEM((tm, tn), jnp.float32)],
        ),
        compiler_params=pltpu.CompilerParams(
            dimension_semantics=("parallel", "parallel", "arbitrary")),
    )(x2d, w_b, b2d)


# ---------------------------------------------------------------------------
# Kernel 2: flash-style causal attention with adaptive bias h (online softmax)
#   att = softmax( mask( q k^T + h ) ) ;  y = att @ v      (scale folded into q)
# ---------------------------------------------------------------------------
def _flash_attn_kernel(qi_tbl, ki_tbl, q_ref, k_ref, v_ref, h_ref, o_ref,
                       m_sc, l_sc, acc_sc):
    s_idx = pl.program_id(2)
    qi = qi_tbl[s_idx]
    ki = ki_tbl[s_idx]

    tq = q_ref.shape[2]
    tk = k_ref.shape[2]
    hd = q_ref.shape[3]
    p_dtype = jnp.bfloat16 if _EXP_IN_BF16 else jnp.float32

    # First kv block of this q tile: reset the online-softmax state.
    @pl.when(ki == 0)
    def _():
        m_sc[...] = jnp.full(m_sc.shape, -jnp.inf, m_sc.dtype)
        l_sc[...] = jnp.zeros_like(l_sc)
        acc_sc[...] = jnp.zeros_like(acc_sc)

    q = q_ref[0, 0]                          # (tq, hd) bf16 (1/sqrt(hd) pre-folded)
    k = k_ref[0, 0]                          # (tk, hd) bf16
    v = v_ref[0, 0]                          # (tk, hd) bf16
    hb = h_ref[0, 0].astype(jnp.float32)     # (tq, tk) adaptive bias (caller dtype)

    # q @ k^T contracting trailing dims -> MXU, no in-kernel transpose.
    s = jax.lax.dot_general(q, k, (((1,), (1,)), ((), ())),
                            preferred_element_type=jnp.float32)
    s = s + hb

    def update(scores):
        # Online softmax; m/l are (tq, 128) f32 with the row value replicated
        # across lanes (unmasked full-vreg loads/stores).
        # NaN-safety invariant: the ki==0 block always gives every row a finite
        # max (column 0 is visible to every row), so m becomes finite before
        # alpha = exp(m_prev - m_next) can see -inf - (-inf).
        m_prev = m_sc[...]
        l_prev = l_sc[...]
        m_next = jnp.maximum(m_prev, jnp.max(scores, axis=-1, keepdims=True))
        alpha = jnp.exp(m_prev - m_next)                              # (tq, 128)
        p = jnp.exp((scores - _lane_bcast(m_next, tk)).astype(p_dtype))
        l_sc[...] = alpha * l_prev + jnp.sum(p, axis=-1,
                                             dtype=jnp.float32, keepdims=True)
        acc_sc[...] = _lane_bcast(alpha, hd) * acc_sc[...] + jax.lax.dot_general(
            p.astype(v.dtype), v, (((1,), (0,)), ((), ())),
            preferred_element_type=jnp.float32)
        m_sc[...] = m_next

    # The causal mask is only materialized on diagonal-straddling blocks;
    # fully-below-diagonal blocks (the vast majority) skip both iotas, the
    # compare and the select.  Fully-above-diagonal blocks are never enumerated.
    needs_mask = (ki * tk + (tk - 1)) > (qi * tq)

    @pl.when(needs_mask)
    def _():
        row = qi * tq + jax.lax.broadcasted_iota(jnp.int32, (tq, tk), 0)
        col = ki * tk + jax.lax.broadcasted_iota(jnp.int32, (tq, tk), 1)
        update(jnp.where(row >= col, s, -jnp.inf))

    @pl.when(jnp.logical_not(needs_mask))
    def _():
        update(s)

    # Last kv block of this q tile: normalize and write out.
    k_last = (qi * tq + (tq - 1)) // tk
    @pl.when(ki == k_last)
    def _():
        inv_l = pl.reciprocal(l_sc[...], approx=True)     # EUP, off the VALU path
        o_ref[0, 0] = (acc_sc[...] * _lane_bcast(inv_l, hd)).astype(o_ref.dtype)


def causal_attention(q, k, v, h, *, tq_target=512, tk_target=512):
    """q/k/v: (B, nh, T, hd) bf16; h: (B, nh, T, T) -> (B, nh, T, hd) bf16."""
    B, nh, T, hd = q.shape
    tq = _pick_tile(T, tq_target, (8,))
    tk = _pick_tile(T, tk_target, (256, 128))
    n_q, n_kv = T // tq, T // tk

    # Triangle enumeration of (qi, ki) blocks: above-diagonal blocks are never
    # visited, so no grid steps (or DMAs) are wasted on them.
    qi_list, ki_list = [], []
    for qi in range(n_q):
        k_last = min(n_kv - 1, ((qi + 1) * tq - 1) // tk)
        for ki in range(k_last + 1):
            qi_list.append(qi)
            ki_list.append(ki)
    qi_tbl = jnp.asarray(qi_list, dtype=jnp.int32)
    ki_tbl = jnp.asarray(ki_list, dtype=jnp.int32)
    n_blocks = len(qi_list)

    return pl.pallas_call(
        _flash_attn_kernel,
        out_shape=jax.ShapeDtypeStruct((B, nh, T, hd), jnp.bfloat16),
        grid_spec=pltpu.PrefetchScalarGridSpec(
            num_scalar_prefetch=2,
            grid=(B, nh, n_blocks),
            in_specs=[
                pl.BlockSpec((1, 1, tq, hd),
                             lambda b, n, s, qt, kt: (b, n, qt[s], 0)),
                pl.BlockSpec((1, 1, tk, hd),
                             lambda b, n, s, qt, kt: (b, n, kt[s], 0)),
                pl.BlockSpec((1, 1, tk, hd),
                             lambda b, n, s, qt, kt: (b, n, kt[s], 0)),
                pl.BlockSpec((1, 1, tq, tk),
                             lambda b, n, s, qt, kt: (b, n, qt[s], kt[s])),
            ],
            out_specs=pl.BlockSpec((1, 1, tq, hd),
                                   lambda b, n, s, qt, kt: (b, n, qt[s], 0)),
            scratch_shapes=[
                pltpu.VMEM((tq, _LANES), jnp.float32),   # running max (lane-replicated)
                pltpu.VMEM((tq, _LANES), jnp.float32),   # running sum (lane-replicated)
                pltpu.VMEM((tq, hd), jnp.float32),       # output accumulator
            ],
        ),
        # B*nh should be >= 2 (and even-ish) so both v7x TensorCores get work.
        compiler_params=pltpu.CompilerParams(
            dimension_semantics=("parallel", "parallel", "arbitrary")),
    )(qi_tbl, ki_tbl, q, k, v, h)


# ---------------------------------------------------------------------------
# Module wrapper
# ---------------------------------------------------------------------------
class CausalSelfAttentionPallas:
    def __init__(self, n_embd, n_head, block_size, key):
        assert n_embd % n_head == 0
        self.n_embd = n_embd
        self.n_head = n_head
        self.block_size = block_size

        ks = jax.random.split(key, 8)

        def init_linear(kw, kb, fan_in, fan_out):
            # PyTorch nn.Linear default init: U(-1/sqrt(fan_in), 1/sqrt(fan_in)).
            # Weights stored pre-transposed as (fan_in, fan_out).
            bound = 1.0 / math.sqrt(fan_in)
            w_t = jax.random.uniform(kw, (fan_in, fan_out), jnp.float32, -bound, bound)
            b = jax.random.uniform(kb, (fan_out,), jnp.float32, -bound, bound)
            return w_t, b

        C = n_embd
        hd = C // n_head
        self.key_wt, self.key_b = init_linear(ks[0], ks[1], C, C)
        self.query_wt, self.query_b = init_linear(ks[2], ks[3], C, C)
        self.value_wt, self.value_b = init_linear(ks[4], ks[5], C, C)
        self.proj_wt, self.proj_b = init_linear(ks[6], ks[7], C, C)

        # Kernel-side parameters: bf16 weights (one-time cast), and the
        # 1/sqrt(hd) softmax scale folded into the query projection so the
        # attention kernel never multiplies the score block.
        scale = 1.0 / math.sqrt(hd)
        self._q_wt = (self.query_wt * scale).astype(jnp.bfloat16)
        self._q_b = self.query_b * scale
        self._k_wt = self.key_wt.astype(jnp.bfloat16)
        self._k_b = self.key_b
        self._v_wt = self.value_wt.astype(jnp.bfloat16)
        self._v_b = self.value_b
        self._p_wt = self.proj_wt.astype(jnp.bfloat16)
        self._p_b = self.proj_b

    def __call__(self, x, x_kv, h):
        B, T, C = x.shape
        nh = self.n_head
        hd = C // nh

        # Projections (tiled bf16 matmul kernels, f32 accumulation). x / x_kv
        # stream f32 straight into the kernels (cast to bf16 in-kernel). k and v
        # are separate calls: no fused-KV slice copies in HBM.
        q = linear(x.reshape(B * T, C), self._q_wt, self._q_b, out_dtype=jnp.bfloat16)
        k = linear(x_kv.reshape(B * T, C), self._k_wt, self._k_b, out_dtype=jnp.bfloat16)
        v = linear(x_kv.reshape(B * T, C), self._v_wt, self._v_b, out_dtype=jnp.bfloat16)

        # (B*T, C) -> (B, nh, T, hd)
        # TODO(synk): fold these head relayouts into the kernels (in-kernel head
        # loop over (tq, C) slabs); kept as cheap bf16 XLA copies for lowering
        # safety at arbitrary head_dim.
        def to_heads(t):
            return t.reshape(B, T, nh, hd).transpose(0, 2, 1, 3)
        q, k, v = to_heads(q), to_heads(k), to_heads(v)

        # Stream the (quadratic-in-T) adaptive bias at the caller's dtype and
        # upcast per-tile in-kernel (no wrapper cast pass over the h tensor).
        h_bias = h[:, :, :T, :T]

        y = causal_attention(q, k, v, h_bias)                 # (B, nh, T, hd) bf16
        y = y.transpose(0, 2, 1, 3).reshape(B * T, C)

        # Output projection (attn/resid dropout are identity in eval mode).
        y = linear(y, self._p_wt, self._p_b, out_dtype=jnp.float32)
        return y.reshape(B, T, C), [], [], [], []


# ---------------------------------------------------------------------------
# Pure-JAX f32 reference (for correctness check)
# ---------------------------------------------------------------------------
def reference_forward(mod, x, x_kv, h):
    B, T, C = x.shape
    nh = mod.n_head
    hd = C // nh
    k = (x_kv @ mod.key_wt + mod.key_b).reshape(B, T, nh, hd).transpose(0, 2, 1, 3)
    q = (x @ mod.query_wt + mod.query_b).reshape(B, T, nh, hd).transpose(0, 2, 1, 3)
    v = (x_kv @ mod.value_wt + mod.value_b).reshape(B, T, nh, hd).transpose(0, 2, 1, 3)
    att = jnp.einsum("bhqd,bhkd->bhqk", q, k) / math.sqrt(hd)
    att = h[:, :, :T, :T] + att
    mask = jnp.tril(jnp.ones((T, T)))
    att = jnp.where(mask == 0, -jnp.inf, att)
    att = jax.nn.softmax(att, axis=-1)
    y = jnp.einsum("bhqk,bhkd->bhqd", att, v)
    y = y.transpose(0, 2, 1, 3).reshape(B, T, C)
    y = y @ mod.proj_wt + mod.proj_b
    return y


if __name__ == "__main__":
    B, T, C, NH = 2, 8, 32, 4
    rng = jax.random.PRNGKey(0)
    k_mod, k_x, k_xkv, k_h = jax.random.split(rng, 4)

    mod = CausalSelfAttentionPallas(n_embd=C, n_head=NH, block_size=T, key=k_mod)

    x = jax.random.normal(k_x, (B, T, C), jnp.float32)
    x_kv = jax.random.normal(k_xkv, (B, T, C), jnp.float32)
    h = jax.random.normal(k_h, (B, NH, T, T), jnp.float32) * 0.1   # adaptive bias

    y, *_ = mod(x, x_kv, h)
    y = jax.block_until_ready(y)

    y_ref = reference_forward(mod, x, x_kv, h)
    assert y.shape == (B, T, C)
    # bf16 matmuls / bf16 exp + approx reciprocal -> looser tolerance than f32.
    assert jnp.allclose(y, y_ref, atol=5e-2, rtol=5e-2), "mismatch vs reference"

    print("KERNEL_OK")
</pallas_src>

<mosaic_0001>
module attributes {stable_mosaic.version = 11 : i64} {
  func.func @_linear_kernel(%arg0: i32, %arg1: i32, %arg2: i32, %arg3: memref<16x32xf32, #tpu.memory_space<vmem>>, %arg4: memref<32x32xbf16, #tpu.memory_space<vmem>>, %arg5: memref<1x32xf32, #tpu.memory_space<vmem>>, %arg6: memref<16x32xbf16, #tpu.memory_space<vmem>>, %arg7: memref<16x32xf32, #tpu.memory_space<vmem>>) attributes {dimension_semantics = [#tpu.dimension_semantics<parallel>, #tpu.dimension_semantics<parallel>, #tpu.dimension_semantics<arbitrary>], iteration_bounds = array<i64: 1, 1, 1>, scalar_prefetch = 0 : i64, scratch_operands = 1 : i64, tpu.core_type = #tpu.core_type<tc>, window_params = [{transform_indices = @transform_0, window_bounds = array<i64: 16, 32>}, {transform_indices = @transform_1, window_bounds = array<i64: 32, 32>}, {transform_indices = @transform_2, window_bounds = array<i64: 1, 32>}, {transform_indices = @transform_3, window_bounds = array<i64: 16, 32>}]} {
    %c0_i32 = arith.constant 0 : i32
    %0 = arith.cmpi eq, %arg2, %c0_i32 : i32
    %1 = arith.extui %0 : i1 to i32
    %c0_i32_0 = arith.constant 0 : i32
    %2 = arith.cmpi ne, %1, %c0_i32_0 : i32
    scf.if %2 {
      %cst_10 = arith.constant 0.000000e+00 : f32
      %13 = vector.broadcast %cst_10 : f32 to vector<16x32xf32>
      %c0_11 = arith.constant 0 : index
      %c0_12 = arith.constant 0 : index
      %14 = vector.load %arg7[%c0_11, %c0_12] : memref<16x32xf32, #tpu.memory_space<vmem>>, vector<16x32xf32>
      tpu.vector_store %arg7[%c0_11, %c0_12], %13 {strides = array<i32>} : memref<16x32xf32, #tpu.memory_space<vmem>>, vector<16x32xf32>,
    } else {
    }
    %c0 = arith.constant 0 : index
    %c0_1 = arith.constant 0 : index
    %3 = vector.load %arg7[%c0, %c0_1] : memref<16x32xf32, #tpu.memory_space<vmem>>, vector<16x32xf32>
    %c0_2 = arith.constant 0 : index
    %c0_3 = arith.constant 0 : index
    %4 = vector.load %arg3[%c0_2, %c0_3] : memref<16x32xf32, #tpu.memory_space<vmem>>, vector<16x32xf32>
    %5 = arith.truncf %4 : vector<16x32xf32> to vector<16x32xbf16>
    %c0_4 = arith.constant 0 : index
    %c0_5 = arith.constant 0 : index
    %6 = vector.load %arg4[%c0_4, %c0_5] : memref<32x32xbf16, #tpu.memory_space<vmem>>, vector<32x32xbf16>
    %cst = arith.constant dense<0.000000e+00> : vector<16x32xf32>
    %7 = tpu.matmul %5, %6, %cst {dimension_numbers = #tpu.dot_dimension_numbers<[1], [0], [0], [1], [0, 0, 1, 1], [], []>} : vector<16x32xbf16>, vector<32x32xbf16>, vector<16x32xf32> -> vector<16x32xf32>
    %8 = arith.addf %3, %7 : vector<16x32xf32>
    %c0_6 = arith.constant 0 : index
    %c0_7 = arith.constant 0 : index
    %9 = vector.load %arg7[%c0_6, %c0_7] : memref<16x32xf32, #tpu.memory_space<vmem>>, vector<16x32xf32>
    tpu.vector_store %arg7[%c0_6, %c0_7], %8 {strides = array<i32>} : memref<16x32xf32, #tpu.memory_space<vmem>>, vector<16x32xf32>,
    %c0_i32_8 = arith.constant 0 : i32
    %10 = arith.cmpi eq, %arg2, %c0_i32_8 : i32
    %11 = arith.extui %10 : i1 to i32
    %c0_i32_9 = arith.constant 0 : i32
    %12 = arith.cmpi ne, %11, %c0_i32_9 : i32
    scf.if %12 {
      %c0_10 = arith.constant 0 : index
      %c0_11 = arith.constant 0 : index
      %13 = vector.load %arg7[%c0_10, %c0_11] : memref<16x32xf32, #tpu.memory_space<vmem>>, vector<16x32xf32>
      %c0_12 = arith.constant 0 : index
      %c0_13 = arith.constant 0 : index
      %14 = vector.load %arg5[%c0_12, %c0_13] : memref<1x32xf32, #tpu.memory_space<vmem>>, vector<1x32xf32>
      %15 = vector.broadcast %14 : vector<1x32xf32> to vector<16x32xf32>
      %16 = arith.addf %13, %15 : vector<16x32xf32>
      %17 = arith.truncf %16 : vector<16x32xf32> to vector<16x32xbf16>
      %c0_14 = arith.constant 0 : index
      %c0_15 = arith.constant 0 : index
      %18 = vector.load %arg6[%c0_14, %c0_15] : memref<16x32xbf16, #tpu.memory_space<vmem>>, vector<16x32xbf16>
      tpu.vector_store %arg6[%c0_14, %c0_15], %17 {strides = array<i32>} : memref<16x32xbf16, #tpu.memory_space<vmem>>, vector<16x32xbf16>,
    } else {
    }
    return
  }
  func.func @transform_0(%arg0: i32, %arg1: i32, %arg2: i32) -> (i32, i32) {
    %c0_i32 = arith.constant 0 : i32
    return %arg0, %arg2 : i32, i32
  }
  func.func @transform_1(%arg0: i32, %arg1: i32, %arg2: i32) -> (i32, i32) {
    %c0_i32 = arith.constant 0 : i32
    return %arg2, %arg1 : i32, i32
  }
  func.func @transform_2(%arg0: i32, %arg1: i32, %arg2: i32) -> (i32, i32) {
    %c0_i32 = arith.constant 0 : i32
    %c0_i32_0 = arith.constant 0 : i32
    return %c0_i32, %arg1 : i32, i32
  }
  func.func @transform_3(%arg0: i32, %arg1: i32, %arg2: i32) -> (i32, i32) {
    %c0_i32 = arith.constant 0 : i32
    return %arg0, %arg1 : i32, i32
  }
}

</mosaic_0001>

<llo_original>
// kernel: tpu_custom_call.1
$region0: #{tpu_custom_call.1}
  #allocation0 [shape = 'u32[]', space=smem, size = 0x4, offset = 0x4, fixed_abs, tag = 'smem constant byte address 0x4 - core index']
  #allocation1 [shape = 'u32[144,128]{1,0:T(1,128)}', space=vmem, size = 0x12000, scoped, tag = 'internal scratch']
  #allocation2 [shape = 'f32[16,32]{1,0:T(8,128)}', space=vmem, size = 0x2000, scoped, tag = 'scratch operand']
  %s0 = inlined_call_operand.hbm [shape: f32[16,32], index: 0, kind: input, shape index: {}]
  %s1 = inlined_call_operand.hbm [shape: bf16[32,32], index: 1, kind: input, shape index: {}]
  %s2 = inlined_call_operand.vmem [shape: f32[1,32], index: 2, kind: input, shape index: {}]
  %s3 = inlined_call_operand.hbm [shape: bf16[16,32], index: 3, kind: output, shape index: {}]
  %s4 = sld [smem:[#allocation0]]
  $region38: #{tpu_custom_call.1} parent=0
    _
  %s6 = ssub.s32 1, %s4
  %s7 = scalar_select 0, %s6, %s4
  $region1: #{tpu_custom_call.1} parent=0
    #allocation3 [shape = 'u8[8192]{0}', space=vmem, size = 0x2000, scoped, tag = 'input window, operand 0, single buffered']
    #allocation4 [shape = 's32[1]{0}', space=sflag, size = 0x4, scoped, tag = 'scoped memory for tpu_custom_call.1']
    #allocation5 [shape = 's32[1]{0}', space=sflag, size = 0x4, scoped, tag = 'scoped memory for tpu_custom_call.1']
    #allocation6 [shape = 'u8[8192]{0}', space=vmem, size = 0x2000, scoped, tag = 'input window, operand 1, single buffered']
    #allocation7 [shape = 's32[1]{0}', space=sflag, size = 0x4, scoped, tag = 'scoped memory for tpu_custom_call.1']
    #allocation8 [shape = 'u8[4096]{0}', space=vmem, size = 0x1000, scoped, tag = 'output window, operand 0, single buffered']
    %8 = vsyncpa [#allocation4], 0
    %9 = vsyncpa [#allocation7], 0
    %10 = vsyncpa [#allocation5], 0
    // Predicated region
    $region2: #{tpu_custom_call.1} parent=1 // pred_check
      _
    $region3: #{tpu_custom_call.1} parent=1 // pred_check_branch
      %12 = sbr.rel (0) target = $region5
    $region4: #{tpu_custom_call.1} parent=1 // pred_region
      %s14 = ssub.s32 256, 256
      %15 = vsyncadd [#allocation4], %s14
      %s16 = sshll.u32 [#allocation3], 4
      %s17 = int_to_ptr.vmem [resolvable:$true] %s16
      %22 = dma.hbm_to_vmem [thread:$0]  %s0, 256, %s17, [#allocation4], 128, 128, 8
    $region5: #{tpu_custom_call.1} parent=1 // pred_fallthru
      _
    // Predicated region
    $region6: #{tpu_custom_call.1} parent=1 // pred_check
      _
    $region7: #{tpu_custom_call.1} parent=1 // pred_check_branch
      %24 = sbr.rel (0) target = $region9
    $region8: #{tpu_custom_call.1} parent=1 // pred_region
      %s26 = ssub.s32 256, 256
      %27 = vsyncadd [#allocation7], %s26
      %s28 = sshll.u32 [#allocation6], 4
      %s29 = int_to_ptr.vmem [resolvable:$true] %s28
      %34 = dma.hbm_to_vmem [thread:$0]  %s1, 256, %s29, [#allocation7], 64, 64, 4
    $region9: #{tpu_custom_call.1} parent=1 // pred_fallthru
      _
    // Predicated region
    $region10: #{tpu_custom_call.1} parent=1 // pred_check
      _
    $region11: #{tpu_custom_call.1} parent=1 // pred_check_branch
      %36 = sbr.rel (0) target = $region13
    $region12: #{tpu_custom_call.1} parent=1 // pred_region
      _
    $region13: #{tpu_custom_call.1} parent=1 // pred_fallthru
      _
    // Predicated region
    $region14: #{tpu_custom_call.1} parent=1 // pred_check
      _
    $region15: #{tpu_custom_call.1} parent=1 // pred_check_branch
      %38 = sbr.rel (0) target = $region17
    $region16: #{tpu_custom_call.1} parent=1 // pred_region
      %39 = dma.done [#allocation4], 256
    $region17: #{tpu_custom_call.1} parent=1 // pred_fallthru
      _
    // Predicated region
    $region18: #{tpu_custom_call.1} parent=1 // pred_check
      _
    $region19: #{tpu_custom_call.1} parent=1 // pred_check_branch
      %41 = sbr.rel (0) target = $region21
    $region20: #{tpu_custom_call.1} parent=1 // pred_region
      %42 = dma.done [#allocation7], 256
    $region21: #{tpu_custom_call.1} parent=1 // pred_fallthru
      _
    %p44 = scmp.eq.s32.totalorder 0, 0
    // Predicated region
    $region22: #{tpu_custom_call.1} parent=1 // pred_check
      %p45 = pneg %p44
    $region23: #{tpu_custom_call.1} parent=1 // pred_check_branch
      %47 = sbr.rel (%p45) target = $region25
    $region24: #{tpu_custom_call.1} parent=1 // pred_region
      %vm48 = vcmask 261120
      %49 = vst.msk [vmem:[#allocation2] sm:$0xff] %vm48, 0.0
      %50 = vst.msk [vmem:[#allocation2 + $0x8] sm:$0xff] %vm48, 0.0
    $region25: #{tpu_custom_call.1} parent=1 // pred_fallthru
      _
    %v51 = vld [vmem:[#allocation2] sm:$0xff]
    %v52 = vld [vmem:[#allocation2 + $0x8] sm:$0xff]
    %v53 = vld [vmem:[#allocation3] sm:$0xff]
    %v54 = vld [vmem:[#allocation3 + $0x8] sm:$0xff]
    %v55 = vpack.c.bf16 %v54, %v53
    %v56 = vld [vmem:[#allocation6] sm:$0xf]
    %v57 = vld [vmem:[#allocation6 + $0x4] sm:$0xf]
    %v58 = vld [vmem:[#allocation6 + $0x8] sm:$0xf]
    %v59 = vld [vmem:[#allocation6 + $0xc] sm:$0xf]
    %v64 = vunpack.c.l.b16 %v56
    %v65 = vunpack.c.l.b16 %v57
    %v66 = vunpack.c.l.b16 %v58
    %v67 = vunpack.c.l.b16 %v59
    %v68 = vpack.c.b16 %v65, %v64
    %v69 = vpack.c.b16 %v67, %v66
    %vm72 = vcmask 261120
    %v74 = vsel %vm72, %v55, 0
    %76 = vmatprep.subr.bf16.mxu0 0
    %77 = vmatpush1.bf16.msra.mxu0 0
    %78 = vmatprep.subr.bf16.mxu0 0
    %79 = vmatpush1.bf16.msra.mxu0 0
    %80 = vmatprep.subr.bf16.mxu0 0
    %81 = vmatpush1.bf16.msra.mxu0 0
    %82 = vmatprep.subr.bf16.mxu0 0
    %83 = vmatpush1.bf16.msra.mxu0 0
    %84 = vmatprep.subr.bf16.mxu0 0
    %85 = vmatpush1.bf16.msra.mxu0 0
    %86 = vmatprep.subr.bf16.mxu0 0
    %87 = vmatpush1.bf16.msra.mxu0 0
    %88 = vmatprep.subr.bf16.mxu0 0
    %89 = vmatpush1.bf16.msra.mxu0 %v69
    %90 = vmatprep.subr.bf16.mxu0 0
    %91 = vmatpush1.bf16.msra.mxu0 %v68
    %92 = vmatprep.subr.bf16.mxu0 0
    %93 = vmatpush2.bf16.msra.mxu0 0
    %94 = vmatprep.subr.bf16.mxu0 0
    %95 = vmatpush2.bf16.msra.mxu0 0
    %96 = vmatprep.subr.bf16.mxu0 0
    %97 = vmatpush2.bf16.msra.mxu0 0
    %98 = vmatprep.subr.bf16.mxu0 0
    %99 = vmatpush2.bf16.msra.mxu0 0
    %100 = vmatprep.subr.bf16.mxu0 0
    %101 = vmatpush2.bf16.msra.mxu0 0
    %102 = vmatprep.subr.bf16.mxu0 0
    %103 = vmatpush2.bf16.msra.mxu0 0
    %104 = vmatprep.subr.bf16.mxu0 0
    %105 = vmatpush2.bf16.msra.mxu0 0
    %106 = vmatprep.subr.bf16.mxu0 0
    %107 = vmatpush2.bf16.msra.mxu0 0
    %108 = vmatprep.mubr.bf16.mxu0 0
    %109 = vmatmul.mubr.bf16.gmra.mxu0 %v74
    %v110 = vpop.f32.mrf.mxu0
    %v111 = vadd.f32 0.0, %v110
    %v112 = vpop.f32.mrf.mxu0
    %v113 = vpop.f32.mrf.mxu0
    %v114 = vadd.f32 0.0, %v113
    %v115 = vpop.f32.mrf.mxu0
    %116 = vdwg.mxu0
    %v117 = vadd.f32 %v51, %v111
    %v118 = vadd.f32 %v52, %v114
    %119 = vst.msk [vmem:[#allocation2] sm:$0xff] %vm72, %v117
    %120 = vst.msk [vmem:[#allocation2 + $0x8] sm:$0xff] %vm72, %v118
    // Predicated region
    $region26: #{tpu_custom_call.1} parent=1 // pred_check
      %p121 = pneg %p44
    $region27: #{tpu_custom_call.1} parent=1 // pred_check_branch
      %123 = sbr.rel (%p121) target = $region29
    $region28: #{tpu_custom_call.1} parent=1 // pred_region
      %v124 = vld [vmem:[#allocation2] sm:$0xff]
      %v125 = vld [vmem:[#allocation2 + $0x8] sm:$0xff]
      %v126 = vld [vmem:[%s2] sm:$0x1]
      %v128 = vlaneseq
      %v129 = vshrl.u32 %v128, 7
      %v130 = vsub.s32 0, %v129
      %v131 = vrot.slane %v126, %v130
      %v133 = vadd.f32 %v124, %v131
      %v134 = vadd.f32 %v125, %v131
      %v135 = vpack.c.bf16 %v134, %v133
      %v137 = vunpack.c.l.b16 %v135
      %v138 = vunpack.c.h.b16 %v135
      %v139 = vpack.c.b16 %v137, %v137
      %v140 = vpack.c.b16 %v138, %v138
      %vm143 = vcmask 257024
      %144 = vst.msk [vmem:[#allocation8] sm:$0xf] %vm143, %v139
      %145 = vst.msk [vmem:[#allocation8 + $0x4] sm:$0xf] %vm143, %v140
    $region29: #{tpu_custom_call.1} parent=1 // pred_fallthru
      _
    // Predicated region
    $region30: #{tpu_custom_call.1} parent=1 // pred_check
      _
    $region31: #{tpu_custom_call.1} parent=1 // pred_check_branch
      %147 = sbr.rel (0) target = $region33
    $region32: #{tpu_custom_call.1} parent=1 // pred_region
      %s149 = ssub.s32 128, 128
      %150 = vsyncadd [#allocation5], %s149
      %s151 = sshll.u32 [#allocation8], 4
      %s152 = int_to_ptr.vmem [resolvable:$true] %s151
      %157 = dma.vmem_to_hbm [thread:$0]  %s152, 128, %s3, [#allocation5], 64, 64, 4
    $region33: #{tpu_custom_call.1} parent=1 // pred_fallthru
      _
    // Predicated region
    $region34: #{tpu_custom_call.1} parent=1 // pred_check
      _
    $region35: #{tpu_custom_call.1} parent=1 // pred_check_branch
      %159 = sbr.rel (0) target = $region37
    $region36: #{tpu_custom_call.1} parent=1 // pred_region
      %160 = dma.done [#allocation5], 128
    $region37: #{tpu_custom_call.1} parent=1 // pred_fallthru
      _
    %161 = vsyncpa [#allocation4], 1
    %162 = vsyncpa [#allocation7], 1
    %163 = vsyncpa [#allocation5], 1

</llo_original>
